<compile_context>
chip_gen: v6e
topology: v6e:2x2x1
jax: 0.10.0
libtpu: 0.0.40
codegen_flags: <defaults>
</compile_context>

<pallas_src>
import jax
import jax.numpy as jnp
from jax.experimental import pallas as pl
from jax.experimental.pallas import tpu as pltpu


def _t2v_fused_kernel(tau_ref, w_ref, b_ref, mask_ref, out_ref):
    """out = where(periodic, cos(tau @ W + Bias), tau @ W + Bias)."""
    tau = tau_ref[...].astype(jnp.float32)
    w = w_ref[...].astype(jnp.float32)
    y = jnp.dot(tau, w, preferred_element_type=jnp.float32)   # MXU
    y = y + b_ref[...].astype(jnp.float32)                    # (1,N) or (TB,N) bias
    periodic = mask_ref[...] > 0.5                             # (1, N) -> broadcast
    out = jnp.where(periodic, jnp.cos(y), y)                   # VPU select, no concat
    out_ref[...] = out.astype(out_ref.dtype)


def cosine_activation(tau, w, b, w0, b0, *, block_rows=None):
    """Pallas implementation of CosineActivation.forward(tau)."""
    B, F = tau.shape
    K = w.shape[1]                    # out_features - 1
    OUT = K + 1
    out_dtype = tau.dtype

    # ---- fuse the two linear maps (host side, once) -------------------------
    Wc = jnp.concatenate([w, w0], axis=1)       # (F, OUT)
    Bc = jnp.concatenate([b, b0], axis=1)       # (R, OUT), R in {1, B} (torch broadcast)
    R = Bc.shape[0]
    if R not in (1, B):
        raise ValueError(
            f"bias rows ({R}) must equal batch ({B}) or 1 (torch broadcast rule)")

    # ---- lane packing: p consecutive batch rows -> one 128-lane row ---------
    if OUT < 128 and 128 % OUT == 0 and B % (128 // OUT) == 0:
        p = 128 // OUT
    else:
        p = 1
    Bp_rows, Fp, OUTp = B // p, p * F, p * OUT

    tau_p = tau.reshape(Bp_rows, Fp)            # free row-major reinterpretation
    if p > 1:
        eye = jnp.eye(p, dtype=Wc.dtype)
        # block-diagonal weight: W_p[g*F+f, q*OUT+k] = (g==q) * Wc[f,k]
        W_p = (eye[:, None, :, None] * Wc[None, :, None, :]).reshape(Fp, OUTp)
        B_p = Bc.reshape(Bp_rows, OUTp) if R == B else jnp.tile(Bc, (1, p))
    else:
        W_p, B_p = Wc, Bc
    bias_rows = B_p.shape[0]

    # periodic-column mask over the packed lane axis (1.0 -> cos, 0.0 -> linear)
    mask = jnp.tile(
        jnp.concatenate(
            [jnp.ones((1, K), jnp.float32), jnp.zeros((1, 1), jnp.float32)], axis=1),
        (1, p))                                  # (1, OUTp)

    # ---- batch tiling --------------------------------------------------------
    if block_rows is None:
        TB = min(Bp_rows, 1024)                  # big tiles; fits v7x VMEM easily
    else:
        TB = max(1, min(block_rows, Bp_rows))
    if TB != Bp_rows and TB % 8 != 0:            # sublane alignment for partial tiles
        TB = max(8, (TB // 8) * 8)
        if TB >= Bp_rows:
            TB = Bp_rows
    grid = (pl.cdiv(Bp_rows, TB),)

    if bias_rows == Bp_rows:                     # row-varying bias: tile with batch
        bias_spec = pl.BlockSpec((TB, OUTp), lambda i: (i, 0))
    else:                                        # broadcast bias: VMEM-resident
        bias_spec = pl.BlockSpec((bias_rows, OUTp), lambda i: (0, 0))

    cost = pl.CostEstimate(
        flops=int(2 * Bp_rows * Fp * OUTp),
        transcendentals=int(Bp_rows * OUTp),
        bytes_accessed=int(4 * (tau_p.size + W_p.size + B_p.size
                                + mask.size + Bp_rows * OUTp)),
    )

    out_p = pl.pallas_call(
        _t2v_fused_kernel,
        grid=grid,
        out_shape=jax.ShapeDtypeStruct((Bp_rows, OUTp), out_dtype),
        in_specs=[
            pl.BlockSpec((TB, Fp), lambda i: (i, 0)),       # tau tile
            pl.BlockSpec((Fp, OUTp), lambda i: (0, 0)),     # fused weight (resident)
            bias_spec,                                      # fused bias
            pl.BlockSpec((1, OUTp), lambda i: (0, 0)),      # periodic mask (resident)
        ],
        out_specs=pl.BlockSpec((TB, OUTp), lambda i: (i, 0)),
        compiler_params=pltpu.CompilerParams(
            dimension_semantics=("parallel",)),             # 2-TC split on v7x
        cost_estimate=cost,
    )(tau_p, W_p, B_p, mask)

    return out_p.reshape(B, OUT)                 # free unpack back to (B, OUT)


# --------------------------------- demo --------------------------------------
def _reference(tau, w, b, w0, b0):
    # Pure-JAX transcription of the PyTorch forward (torch broadcast rules).
    return jnp.concatenate([jnp.cos(tau @ w + b), tau @ w0 + b0], axis=1)


def _make_params(key, batch, in_features, out_features):
    ks = jax.random.split(key, 5)
    tau = jax.random.normal(ks[0], (batch, in_features), jnp.float32)
    w = jax.random.normal(ks[1], (in_features, out_features - 1), jnp.float32)
    b = jax.random.normal(ks[2], (in_features, out_features - 1), jnp.float32)
    w0 = jax.random.normal(ks[3], (in_features, 1), jnp.float32)
    b0 = jax.random.normal(ks[4], (in_features, 1), jnp.float32)
    return tau, w, b, w0, b0


if __name__ == "__main__":
    key = jax.random.PRNGKey(0)
    k1, k2, k3 = jax.random.split(key, 3)

    cases = [
        # (key, batch, in_features, out_features, block_rows)
        (k1, 64, 64, 32, 8),    # batch == in_features; packed p=4; 2 grid steps
        (k2, 16, 1, 32, None),  # in_features == 1 (bias broadcasts); packed p=4
        (k3, 8, 8, 33, None),   # out doesn't divide 128 -> unpacked fallback
    ]

    for kk, B, F, OUT, br in cases:
        tau, w, b, w0, b0 = _make_params(kk, B, F, OUT)
        out = jax.block_until_ready(
            cosine_activation(tau, w, b, w0, b0, block_rows=br))
        ref = _reference(tau, w, b, w0, b0)
        assert out.shape == (B, OUT), (out.shape, (B, OUT))
        err = float(jnp.max(jnp.abs(out - ref)))
        assert jnp.allclose(out, ref, atol=1e-4, rtol=1e-4), (B, F, OUT, err)

    print("KERNEL_OK")
</pallas_src>

<mosaic_0001>
module attributes {stable_mosaic.version = 11 : i64} {
  func.func @_t2v_fused_kernel(%arg0: i32, %arg1: memref<8x256xf32, #tpu.memory_space<vmem>>, %arg2: memref<256x128xf32, #tpu.memory_space<vmem>>, %arg3: memref<8x128xf32, #tpu.memory_space<vmem>>, %arg4: memref<1x128xf32, #tpu.memory_space<vmem>>, %arg5: memref<8x128xf32, #tpu.memory_space<vmem>>) attributes {dimension_semantics = [#tpu.dimension_semantics<parallel>], iteration_bounds = array<i64: 2>, scalar_prefetch = 0 : i64, scratch_operands = 0 : i64, tpu.core_type = #tpu.core_type<tc>, window_params = [{transform_indices = @transform_0, window_bounds = array<i64: 8, 256>}, {pipeline_mode = #tpu.pipeline_mode<synchronous>, transform_indices = @transform_1, window_bounds = array<i64: 256, 128>}, {transform_indices = @transform_2, window_bounds = array<i64: 8, 128>}, {pipeline_mode = #tpu.pipeline_mode<synchronous>, transform_indices = @transform_3, window_bounds = array<i64: 1, 128>}, {transform_indices = @transform_4, window_bounds = array<i64: 8, 128>}]} {
    %c0 = arith.constant 0 : index
    %c0_0 = arith.constant 0 : index
    %0 = vector.load %arg1[%c0, %c0_0] : memref<8x256xf32, #tpu.memory_space<vmem>>, vector<8x256xf32>
    %c0_1 = arith.constant 0 : index
    %c0_2 = arith.constant 0 : index
    %1 = vector.load %arg2[%c0_1, %c0_2] : memref<256x128xf32, #tpu.memory_space<vmem>>, vector<256x128xf32>
    %cst = arith.constant dense<0.000000e+00> : vector<8x128xf32>
    %2 = tpu.matmul %0, %1, %cst {dimension_numbers = #tpu.dot_dimension_numbers<[1], [0], [0], [1], [0, 0, 1, 1], [], []>} : vector<8x256xf32>, vector<256x128xf32>, vector<8x128xf32> -> vector<8x128xf32>
    %c0_3 = arith.constant 0 : index
    %c0_4 = arith.constant 0 : index
    %3 = vector.load %arg3[%c0_3, %c0_4] : memref<8x128xf32, #tpu.memory_space<vmem>>, vector<8x128xf32>
    %4 = arith.addf %2, %3 : vector<8x128xf32>
    %c0_5 = arith.constant 0 : index
    %c0_6 = arith.constant 0 : index
    %5 = vector.load %arg4[%c0_5, %c0_6] : memref<1x128xf32, #tpu.memory_space<vmem>>, vector<1x128xf32>
    %cst_7 = arith.constant 5.000000e-01 : f32
    %6 = vector.broadcast %cst_7 : f32 to vector<1x128xf32>
    %7 = arith.cmpf ogt, %5, %6 : vector<1x128xf32>
    %8 = math.cos %4 : vector<8x128xf32>
    %9 = vector.shape_cast %7 : vector<1x128xi1> to vector<1x128xi1>
    %10 = vector.broadcast %9 : vector<1x128xi1> to vector<8x128xi1>
    %11 = arith.select %10, %8, %4 : vector<8x128xi1>, vector<8x128xf32>
    %c0_8 = arith.constant 0 : index
    %c0_9 = arith.constant 0 : index
    %12 = vector.load %arg5[%c0_8, %c0_9] : memref<8x128xf32, #tpu.memory_space<vmem>>, vector<8x128xf32>
    tpu.vector_store %arg5[%c0_8, %c0_9], %11 {strides = array<i32>} : memref<8x128xf32, #tpu.memory_space<vmem>>, vector<8x128xf32>,
    return
  }
  func.func @transform_0(%arg0: i32) -> (i32, i32) {
    %c0_i32 = arith.constant 0 : i32
    %c0_i32_0 = arith.constant 0 : i32
    return %arg0, %c0_i32 : i32, i32
  }
  func.func @transform_1(%arg0: i32) -> (i32, i32) {
    %c0_i32 = arith.constant 0 : i32
    %c0_i32_0 = arith.constant 0 : i32
    %c0_i32_1 = arith.constant 0 : i32
    return %c0_i32, %c0_i32_0 : i32, i32
  }
  func.func @transform_2(%arg0: i32) -> (i32, i32) {
    %c0_i32 = arith.constant 0 : i32
    %c0_i32_0 = arith.constant 0 : i32
    return %arg0, %c0_i32 : i32, i32
  }
  func.func @transform_3(%arg0: i32) -> (i32, i32) {
    %c0_i32 = arith.constant 0 : i32
    %c0_i32_0 = arith.constant 0 : i32
    %c0_i32_1 = arith.constant 0 : i32
    return %c0_i32, %c0_i32_0 : i32, i32
  }
  func.func @transform_4(%arg0: i32) -> (i32, i32) {
    %c0_i32 = arith.constant 0 : i32
    %c0_i32_0 = arith.constant 0 : i32
    return %arg0, %c0_i32 : i32, i32
  }
}

</mosaic_0001>

<llo_original>
// kernel: tpu_custom_call.1
$region0: #{tpu_custom_call.1}
  #allocation0 [shape = 'u32[]', space=smem, size = 0x4, offset = 0x4, fixed_abs, tag = 'smem constant byte address 0x4 - core index']
  #allocation1 [shape = 'u32[144,128]{1,0:T(1,128)}', space=vmem, size = 0x12000, scoped, tag = 'internal scratch']
  %s0 = inlined_call_operand.hbm [shape: f32[16,256], index: 0, kind: input, shape index: {}]
  %s1 = inlined_call_operand.hbm [shape: f32[256,128], index: 1, kind: input, shape index: {}]
  %s2 = inlined_call_operand.hbm [shape: f32[16,128], index: 2, kind: input, shape index: {}]
  %s3 = inlined_call_operand.vmem [shape: f32[1,128], index: 3, kind: input, shape index: {}]
  %s4 = inlined_call_operand.hbm [shape: f32[16,128], index: 4, kind: output, shape index: {}]
  %s5 = sld [smem:[#allocation0]]
  $region61: #{tpu_custom_call.1} parent=0
    _
  %s7 = ssub.s32 1, %s5
  %s8 = scalar_select 0, %s7, %s5
  $region1: #{tpu_custom_call.1} parent=0
    #allocation2 [shape = 'u8[16384]{0}', space=vmem, size = 0x4000, scoped, tag = 'input window, operand 0']
    #allocation3 [shape = 's32[2]{0}', space=sflag, size = 0x8, scoped, tag = 'scoped memory for tpu_custom_call.1']
    #allocation4 [shape = 's32[2]{0}', space=sflag, size = 0x8, scoped, tag = 'scoped memory for tpu_custom_call.1']
    #allocation5 [shape = 'u8[131072]{0}', space=vmem, size = 0x20000, scoped, tag = 'input window, operand 1, single buffered']
    #allocation6 [shape = 's32[1]{0}', space=sflag, size = 0x4, scoped, tag = 'scoped memory for tpu_custom_call.1']
    #allocation7 [shape = 'u8[8192]{0}', space=vmem, size = 0x2000, scoped, tag = 'input window, operand 2']
    #allocation8 [shape = 'u8[8192]{0}', space=vmem, size = 0x2000, scoped, tag = 'output window, operand 0']
    %9 = vsyncpa [#allocation3], 0
    %s10 = scalar_lea.sflag [#allocation3], 1
    %11 = vsyncpa %s10, 0
    %12 = vsyncpa [#allocation6], 0
    %13 = vsyncpa [#allocation4], 0
    %s14 = scalar_lea.sflag [#allocation4], 1
    %15 = vsyncpa %s14, 0
    loop: start=0, step=1, limit=4
    $region2: #{tpu_custom_call.1} parent=1 // loop_pre_header
      _
    $region3: #{tpu_custom_call.1} parent=1 // loop_header
      %s17 = sphi 0, %s21
      %p18 = scmp.ge.s32.totalorder %s17, 4
      %s27 = sphi 0, %s29
      %s30 = sphi 0, %s27
      %s31 = sphi 0, %s30
      %s47 = sphi 0, %s31
      %s51 = sphi 0, %s51
      %s53 = sphi 0, %s51
      %s54 = sphi 0, %s53
      %s68 = sphi 0, %s54
      %s74 = sphi 0, %s76
      %s77 = sphi 0, %s74
      %s78 = sphi 0, %s77
      %s94 = sphi 0, %s78
      %s98 = sphi 0, %s98
      %s100 = sphi 0, %s98
      %s101 = sphi 0, %s100
      %s115 = sphi 0, %s101
      %s121 = sphi 0, %s123
      %s124 = sphi 0, %s121
      %s125 = sphi 0, %s124
      %s141 = sphi 0, %s125
    $region4: #{tpu_custom_call.1} parent=1 // loop_header_branch
      %20 = sbr.rel (%p18) target = $region8
    $region5: #{tpu_custom_call.1} parent=1 // loop_body
      %s22 = ssub.s32 %s17, 1
      %s23 = ssub.s32 %s17, 2
      %s24 = sadd.s32 %s17, 1
      %s25 = ssub.s32 %s17, %s24
      %p26 = scmp.eq.s32.totalorder %s25, 0
      %s28 = sadd.s32 %s27, 1
      %s29 = scalar_select %p26, %s27, %s28
      %p32 = pneg %p26
      %p33 = scmp.eq.s32.totalorder %s17, 1
      %p34 = por %p32, %p33
      %p35 = scmp.ne.s32.totalorder %s27, %s30
      %p36 = scmp.eq.s32.totalorder %s17, 0
      %p37 = por %p35, %p36
      %p38 = scmp.ne.s32.totalorder %s27, %s30
      %p39 = scmp.eq.s32.totalorder %s22, 1
      %p40 = por %p38, %p39
      %p41 = scmp.ne.s32.totalorder %s30, %s31
      %p42 = scmp.eq.s32.totalorder %s22, 0
      %p43 = por %p41, %p42
      %p44 = scmp.ne.s32.totalorder %s30, %s31
      %p45 = scmp.eq.s32.totalorder %s23, 1
      %p46 = por %p44, %p45
      %p48 = scmp.ne.s32.totalorder %s31, %s47
      %p49 = scmp.eq.s32.totalorder %s23, 0
      %p50 = por %p48, %p49
      %s52 = sadd.s32 %s51, 1
      %p55 = scmp.eq.s32.totalorder %s17, 1
      %p56 = scmp.ne.s32.totalorder %s51, %s53
      %p57 = scmp.eq.s32.totalorder %s17, 0
      %p58 = por %p56, %p57
      %p59 = scmp.ne.s32.totalorder %s51, %s53
      %p60 = scmp.eq.s32.totalorder %s22, 1
      %p61 = por %p59, %p60
      %p62 = scmp.ne.s32.totalorder %s53, %s54
      %p63 = scmp.eq.s32.totalorder %s22, 0
      %p64 = por %p62, %p63
      %p65 = scmp.ne.s32.totalorder %s53, %s54
      %p66 = scmp.eq.s32.totalorder %s23, 1
      %p67 = por %p65, %p66
      %p69 = scmp.ne.s32.totalorder %s54, %s68
      %p70 = scmp.eq.s32.totalorder %s23, 0
      %p71 = por %p69, %p70
      %s72 = ssub.s32 %s17, %s24
      %p73 = scmp.eq.s32.totalorder %s72, 0
      %s75 = sadd.s32 %s74, 1
      %s76 = scalar_select %p73, %s74, %s75
      %p79 = pneg %p73
      %p80 = scmp.eq.s32.totalorder %s17, 1
      %p81 = por %p79, %p80
      %p82 = scmp.ne.s32.totalorder %s74, %s77
      %p83 = scmp.eq.s32.totalorder %s17, 0
      %p84 = por %p82, %p83
      %p85 = scmp.ne.s32.totalorder %s74, %s77
      %p86 = scmp.eq.s32.totalorder %s22, 1
      %p87 = por %p85, %p86
      %p88 = scmp.ne.s32.totalorder %s77, %s78
      %p89 = scmp.eq.s32.totalorder %s22, 0
      %p90 = por %p88, %p89
      %p91 = scmp.ne.s32.totalorder %s77, %s78
      %p92 = scmp.eq.s32.totalorder %s23, 1
      %p93 = por %p91, %p92
      %p95 = scmp.ne.s32.totalorder %s78, %s94
      %p96 = scmp.eq.s32.totalorder %s23, 0
      %p97 = por %p95, %p96
      %s99 = sadd.s32 %s98, 1
      %p102 = scmp.eq.s32.totalorder %s17, 1
      %p103 = scmp.ne.s32.totalorder %s98, %s100
      %p104 = scmp.eq.s32.totalorder %s17, 0
      %p105 = por %p103, %p104
      %p106 = scmp.ne.s32.totalorder %s98, %s100
      %p107 = scmp.eq.s32.totalorder %s22, 1
      %p108 = por %p106, %p107
      %p109 = scmp.ne.s32.totalorder %s100, %s101
      %p110 = scmp.eq.s32.totalorder %s22, 0
      %p111 = por %p109, %p110
      %p112 = scmp.ne.s32.totalorder %s100, %s101
      %p113 = scmp.eq.s32.totalorder %s23, 1
      %p114 = por %p112, %p113
      %p116 = scmp.ne.s32.totalorder %s101, %s115
      %p117 = scmp.eq.s32.totalorder %s23, 0
      %p118 = por %p116, %p117
      %s119 = ssub.s32 %s17, %s24
      %p120 = scmp.eq.s32.totalorder %s119, 0
      %s122 = sadd.s32 %s121, 1
      %s123 = scalar_select %p120, %s121, %s122
      %p126 = pneg %p120
      %p127 = scmp.eq.s32.totalorder %s17, 1
      %p128 = por %p126, %p127
      %p129 = scmp.ne.s32.totalorder %s121, %s124
      %p130 = scmp.eq.s32.totalorder %s17, 0
      %p131 = por %p129, %p130
      %p132 = scmp.ne.s32.totalorder %s121, %s124
      %p133 = scmp.eq.s32.totalorder %s22, 1
      %p134 = por %p132, %p133
      %p135 = scmp.ne.s32.totalorder %s124, %s125
      %p136 = scmp.eq.s32.totalorder %s22, 0
      %p137 = por %p135, %p136
      %p138 = scmp.ne.s32.totalorder %s124, %s125
      %p139 = scmp.eq.s32.totalorder %s23, 1
      %p140 = por %p138, %p139
      %p142 = scmp.ne.s32.totalorder %s125, %s141
      %p143 = scmp.eq.s32.totalorder %s23, 0
      %p144 = por %p142, %p143
      %p145 = scmp.le.s32.totalorder 1, %s17
      %p146 = scmp.lt.s32.totalorder %s17, 3
      %p147 = pnand %p145, %p146
      %p148 = pneg %p147
      // Predicated region
      $region9: #{tpu_custom_call.1} parent=5 // pred_check
        _
      $region10: #{tpu_custom_call.1} parent=5 // pred_check_branch
        %150 = sbr.rel (%p147) target = $region12
      $region11: #{tpu_custom_call.1} parent=5 // pred_region
        %s151 = ssub.s32 %s17, 1
        // Predicated region
        $region13: #{tpu_custom_call.1} parent=11 // pred_check
          %p152 = pneg %p64
        $region14: #{tpu_custom_call.1} parent=11 // pred_check_branch
          %154 = sbr.rel (%p152) target = $region16
        $region15: #{tpu_custom_call.1} parent=11 // pred_region
          %s156 = ssub.s32 4096, 4096
          %157 = vsyncadd [#allocation6], %s156
          %s158 = sshll.u32 [#allocation5], 4
          %s159 = int_to_ptr.vmem [resolvable:$true] %s158
          %164 = dma.hbm_to_vmem [thread:$0]  %s1, 4096, %s159, [#allocation6], 128, 128, 8
        $region16: #{tpu_custom_call.1} parent=11 // pred_fallthru
          _
        // Predicated region
        $region17: #{tpu_custom_call.1} parent=11 // pred_check
          %p165 = pneg %p111
        $region18: #{tpu_custom_call.1} parent=11 // pred_check_branch
          %167 = sbr.rel (%p165) target = $region20
        $region19: #{tpu_custom_call.1} parent=11 // pred_region
          _
        $region20: #{tpu_custom_call.1} parent=11 // pred_fallthru
          _
      $region12: #{tpu_custom_call.1} parent=5 // pred_fallthru
        _
      %p168 = scmp.lt.s32.totalorder %s17, 2
      // Predicated region
      $region21: #{tpu_custom_call.1} parent=5 // pred_check
        %p169 = pneg %p168
      $region22: #{tpu_custom_call.1} parent=5 // pred_check_branch
        %171 = sbr.rel (%p169) target = $region24
      $region23: #{tpu_custom_call.1} parent=5 // pred_region
        // Predicated region
        $region25: #{tpu_custom_call.1} parent=23 // pred_check
          %p172 = pneg %p37
        $region26: #{tpu_custom_call.1} parent=23 // pred_check_branch
          %174 = sbr.rel (%p172) target = $region28
        $region27: #{tpu_custom_call.1} parent=23 // pred_region
          %s175 = sand.u32 %s17, 1
          %s176 = scalar_lea.sflag [#allocation3], %s175
          %s177 = sand.u32 %s27, 1
          %s178 = smul.addr %s177, 16
          %s179 = scalar_lea.vmem [#allocation2], %s178
          %s181 = ssub.s32 256, 256
          %182 = vsyncadd %s176, %s181
          %s183 = smul.addr %s17, 2
          %s184 = smul.addr %s183, 128
          %s185 = scalar_lea.hbm %s0, %s184
          %s187 = sshll.u32 %s179, 4
          %s188 = int_to_ptr.vmem [resolvable:$true] %s187
          %190 = dma.hbm_to_vmem [thread:$0]  %s185, 256, %s188, %s176
        $region28: #{tpu_custom_call.1} parent=23 // pred_fallthru
          _
        // Predicated region
        $region29: #{tpu_custom_call.1} parent=23 // pred_check
          %p191 = pneg %p84
        $region30: #{tpu_custom_call.1} parent=23 // pred_check_branch
          %193 = sbr.rel (%p191) target = $region32
        $region31: #{tpu_custom_call.1} parent=23 // pred_region
          %s194 = sand.u32 %s17, 1
          %s195 = scalar_lea.sflag [#allocation3], %s194
          %s196 = sand.u32 %s74, 1
          %s197 = smul.addr %s196, 8
          %s198 = scalar_lea.vmem [#allocation7], %s197
          %s200 = ssub.s32 128, 128
          %201 = vsyncadd %s195, %s200
          %s202 = smul.addr %s17, 128
          %s203 = scalar_lea.hbm %s2, %s202
          %s205 = sshll.u32 %s198, 4
          %s206 = int_to_ptr.vmem [resolvable:$true] %s205
          %208 = dma.hbm_to_vmem [thread:$0]  %s203, 128, %s206, %s195
        $region32: #{tpu_custom_call.1} parent=23 // pred_fallthru
          _
      $region24: #{tpu_custom_call.1} parent=5 // pred_fallthru
        _
      %p209 = scmp.le.s32.totalorder 1, %s17
      %p210 = scmp.lt.s32.totalorder %s17, 3
      %p211 = pnand %p209, %p210
      %p212 = pneg %p211
      // Predicated region
      $region33: #{tpu_custom_call.1} parent=5 // pred_check
        _
      $region34: #{tpu_custom_call.1} parent=5 // pred_check_branch
        %214 = sbr.rel (%p211) target = $region36
      $region35: #{tpu_custom_call.1} parent=5 // pred_region
        %s215 = ssub.s32 %s17, 1
        %s216 = sand.u32 %s22, 1
        %s217 = scalar_lea.sflag [#allocation3], %s216
        %s218 = sand.u32 %s30, 1
        %s219 = smul.addr %s218, 16
        %s220 = scalar_lea.vmem [#allocation2], %s219
        // Predicated region
        $region37: #{tpu_custom_call.1} parent=35 // pred_check
          %p221 = pneg %p43
        $region38: #{tpu_custom_call.1} parent=35 // pred_check_branch
          %223 = sbr.rel (%p221) target = $region40
        $region39: #{tpu_custom_call.1} parent=35 // pred_region
          %224 = dma.done %s217, 256
        $region40: #{tpu_custom_call.1} parent=35 // pred_fallthru
          _
        // Predicated region
        $region41: #{tpu_custom_call.1} parent=35 // pred_check
          %p225 = pneg %p64
        $region42: #{tpu_custom_call.1} parent=35 // pred_check_branch
          %227 = sbr.rel (%p225) target = $region44
        $region43: #{tpu_custom_call.1} parent=35 // pred_region
          %228 = dma.done [#allocation6], 4096
        $region44: #{tpu_custom_call.1} parent=35 // pred_fallthru
          _
        %s229 = sand.u32 %s22, 1
        %s230 = scalar_lea.sflag [#allocation3], %s229
        %s231 = sand.u32 %s77, 1
        %s232 = smul.addr %s231, 8
        %s233 = scalar_lea.vmem [#allocation7], %s232
        // Predicated region
        $region45: #{tpu_custom_call.1} parent=35 // pred_check
          %p234 = pneg %p90
        $region46: #{tpu_custom_call.1} parent=35 // pred_check_branch
          %236 = sbr.rel (%p234) target = $region48
        $region47: #{tpu_custom_call.1} parent=35 // pred_region
          %237 = dma.done %s230, 128
        $region48: #{tpu_custom_call.1} parent=35 // pred_fallthru
          _
        %s238 = sand.u32 %s22, 1
        %s239 = scalar_lea.sflag [#allocation3], %s238
        %s240 = sand.u32 %s30, 1
        %s241 = smul.addr %s240, 16
        %s242 = scalar_lea.vmem [#allocation2], %s241
        %p243 = pneg %p43
        %p244 = pneg %p40
        %p245 = pneg %p64
        %p246 = pneg %p61
        %s247 = sand.u32 %s22, 1
        %s248 = scalar_lea.sflag [#allocation3], %s247
        %s249 = sand.u32 %s77, 1
        %s250 = smul.addr %s249, 8
        %s251 = scalar_lea.vmem [#allocation7], %s250
        %p252 = pneg %p90
        %p253 = pneg %p87
        %p254 = pneg %p111
        %p255 = pneg %p108
        %p256 = pneg %p137
        %p257 = pneg %p134
        %s258 = sand.u32 %s124, 1
        %s259 = scalar_lea.sflag [#allocation4], %s258
        %s260 = sand.u32 %s124, 1
        %s261 = smul.addr %s260, 8
        %s262 = scalar_lea.vmem [#allocation8], %s261
        %v263 = vld [vmem:[%s220] sm:$0xff]
        %v264 = vld [vmem:[%s220 + $0x8] sm:$0xff]
        %v265 = vld [vmem:[#allocation5] sm:$0xff]
        %v266 = vld [vmem:[#allocation5 + $0x8] sm:$0xff]
        %v267 = vld [vmem:[#allocation5 + $0x10] sm:$0xff]
        %v268 = vld [vmem:[#allocation5 + $0x18] sm:$0xff]
        %v269 = vld [vmem:[#allocation5 + $0x20] sm:$0xff]
        %v270 = vld [vmem:[#allocation5 + $0x28] sm:$0xff]
        %v271 = vld [vmem:[#allocation5 + $0x30] sm:$0xff]
        %v272 = vld [vmem:[#allocation5 + $0x38] sm:$0xff]
        %v273 = vld [vmem:[#allocation5 + $0x40] sm:$0xff]
        %v274 = vld [vmem:[#allocation5 + $0x48] sm:$0xff]
        %v275 = vld [vmem:[#allocation5 + $0x50] sm:$0xff]
        %v276 = vld [vmem:[#allocation5 + $0x58] sm:$0xff]
        %v277 = vld [vmem:[#allocation5 + $0x60] sm:$0xff]
        %v278 = vld [vmem:[#allocation5 + $0x68] sm:$0xff]
        %v279 = vld [vmem:[#allocation5 + $0x70] sm:$0xff]
        %v280 = vld [vmem:[#allocation5 + $0x78] sm:$0xff]
        %v281 = vld [vmem:[#allocation5 + $0x80] sm:$0xff]
        %v282 = vld [vmem:[#allocation5 + $0x88] sm:$0xff]
        %v283 = vld [vmem:[#allocation5 + $0x90] sm:$0xff]
        %v284 = vld [vmem:[#allocation5 + $0x98] sm:$0xff]
        %v285 = vld [vmem:[#allocation5 + $0xa0] sm:$0xff]
        %v286 = vld [vmem:[#allocation5 + $0xa8] sm:$0xff]
        %v287 = vld [vmem:[#allocation5 + $0xb0] sm:$0xff]
        %v288 = vld [vmem:[#allocation5 + $0xb8] sm:$0xff]
        %v289 = vld [vmem:[#allocation5 + $0xc0] sm:$0xff]
        %v290 = vld [vmem:[#allocation5 + $0xc8] sm:$0xff]
        %v291 = vld [vmem:[#allocation5 + $0xd0] sm:$0xff]
        %v292 = vld [vmem:[#allocation5 + $0xd8] sm:$0xff]
        %v293 = vld [vmem:[#allocation5 + $0xe0] sm:$0xff]
        %v294 = vld [vmem:[#allocation5 + $0xe8] sm:$0xff]
        %v295 = vld [vmem:[#allocation5 + $0xf0] sm:$0xff]
        %v296 = vld [vmem:[#allocation5 + $0xf8] sm:$0xff]
        %v297 = vld [vmem:[%s233] sm:$0xff]
        %298 = vmatprep.subr.mxu0 0.0
        %299 = vmatpush1.msra.mxu0 %v280
        %300 = vmatprep.subr.mxu0 0.0
        %301 = vmatpush1.msra.mxu0 %v279
        %302 = vmatprep.subr.mxu0 0.0
        %303 = vmatpush1.msra.mxu0 %v278
        %304 = vmatprep.subr.mxu0 0.0
        %305 = vmatpush1.msra.mxu0 %v277
        %306 = vmatprep.subr.mxu0 0.0
        %307 = vmatpush1.msra.mxu0 %v276
        %308 = vmatprep.subr.mxu0 0.0
        %309 = vmatpush1.msra.mxu0 %v275
        %310 = vmatprep.subr.mxu0 0.0
        %311 = vmatpush1.msra.mxu0 %v274
        %312 = vmatprep.subr.mxu0 0.0
        %313 = vmatpush1.msra.mxu0 %v273
        %314 = vmatprep.subr.mxu0 0.0
        %315 = vmatpush1.msra.mxu0 %v272
        %316 = vmatprep.subr.mxu0 0.0
        %317 = vmatpush1.msra.mxu0 %v271
        %318 = vmatprep.subr.mxu0 0.0
        %319 = vmatpush1.msra.mxu0 %v270
        %320 = vmatprep.subr.mxu0 0.0
        %321 = vmatpush1.msra.mxu0 %v269
        %322 = vmatprep.subr.mxu0 0.0
        %323 = vmatpush1.msra.mxu0 %v268
        %324 = vmatprep.subr.mxu0 0.0
        %325 = vmatpush1.msra.mxu0 %v267
        %326 = vmatprep.subr.mxu0 0.0
        %327 = vmatpush1.msra.mxu0 %v266
        %328 = vmatprep.subr.mxu0 0.0
        %329 = vmatpush1.msra.mxu0 %v265
        %330 = vmatprep.subr.mxu0 0.0
        %331 = vmatpush2.msra.mxu0 %v296
        %332 = vmatprep.subr.mxu0 0.0
        %333 = vmatpush2.msra.mxu0 %v295
        %334 = vmatprep.subr.mxu0 0.0
        %335 = vmatpush2.msra.mxu0 %v294
        %336 = vmatprep.subr.mxu0 0.0
        %337 = vmatpush2.msra.mxu0 %v293
        %338 = vmatprep.subr.mxu0 0.0
        %339 = vmatpush2.msra.mxu0 %v292
        %340 = vmatprep.subr.mxu0 0.0
        %341 = vmatpush2.msra.mxu0 %v291
        %342 = vmatprep.subr.mxu0 0.0
        %343 = vmatpush2.msra.mxu0 %v290
        %344 = vmatprep.subr.mxu0 0.0
        %345 = vmatpush2.msra.mxu0 %v289
        %346 = vmatprep.subr.mxu0 0.0
        %347 = vmatpush2.msra.mxu0 %v288
        %348 = vmatprep.subr.mxu0 0.0
        %349 = vmatpush2.msra.mxu0 %v287
        %350 = vmatprep.subr.mxu0 0.0
        %351 = vmatpush2.msra.mxu0 %v286
        %352 = vmatprep.subr.mxu0 0.0
        %353 = vmatpush2.msra.mxu0 %v285
        %354 = vmatprep.subr.mxu0 0.0
        %355 = vmatpush2.msra.mxu0 %v284
        %356 = vmatprep.subr.mxu0 0.0
        %357 = vmatpush2.msra.mxu0 %v283
        %358 = vmatprep.subr.mxu0 0.0
        %359 = vmatpush2.msra.mxu0 %v282
        %360 = vmatprep.subr.mxu0 0.0
        %361 = vmatpush2.msra.mxu0 %v281
        %362 = vmatprep.mubr.f32.mxu0 %v264
        %363 = vmatmul.mubr.f32.gmra.mxu0 %v263
        %v364 = vpop.f32.mrf.mxu0
        %v365 = vadd.f32 %v297, %v364
        %v366 = vpop.f32.mrf.mxu0
        %367 = vdwg.mxu0
        %v368 = vld [vmem:[%s3] sm:$0x1]
        %vm369 = vcmp.gt.f32.partialorder %v368, 0.5
        %v370 = vand.u32 2147483647, %v365
        %vm371 = vcmp.le.f32.partialorder %v370, 0.7853982
        %vm372 = vcmp.lt.s32.totalorder %v365, 0
        %v373 = vand.u32 %v365, 2139095040
        %v374 = vshrl.u32 %v373, 23
        %v375 = vsub.s32 %v374, 127
        %v376 = vand.u32 2147483647, %v365
        %v377 = vand.u32 %v376, 8388607
        %v378 = vor.u32 %v377, 8388608
        %v379 = vsub.s32 0, %v378
        %v380 = vadd.s32 %v375, 1
        %vm381 = vcmp.gt.s32.totalorder %v380, 0
        %v382 = vsel %vm381, %v380, 0
        %v383 = vshrl.u32 %v382, 5
        %v384 = vand.u32 %v382, 31
        %v385 = vsub.s32 32, %v384
        %v386 = vshrl.u32 683565275, %v385
        %v387 = vshll.u32 683565275, %v384
        %v388 = vshrl.u32 2475754826, %v385
        %v389 = vor.u32 %v387, %v388
        %v390 = vshll.u32 2475754826, %v384
        %v391 = vshrl.u32 2131351028, %v385
        %v392 = vor.u32 %v390, %v391
        %v393 = vshll.u32 2131351028, %v384
        %v394 = vshrl.u32 2102212464, %v385
        %v395 = vor.u32 %v393, %v394
        %v396 = vshll.u32 2102212464, %v384
        %v397 = vshrl.u32 920167782, %v385
        %v398 = vor.u32 %v396, %v397
        %v399 = vshll.u32 920167782, %v384
        %v400 = vshrl.u32 1326507024, %v385
        %v401 = vor.u32 %v399, %v400
        %vm402 = vcmp.lt.s32.totalorder %v383, 1
        %vm403 = vcmp.lt.s32.totalorder %v383, 2
        %vm404 = vcmp.lt.s32.totalorder %v383, 3
        %vm405 = vcmp.lt.s32.totalorder %v383, 4
        %v406 = vsel %vm402, %v386, %v389
        %v407 = vsel %vm405, %v395, 2102212464
        %v408 = vsel %vm404, %v392, %v407
        %v409 = vsel %vm403, %v406, %v408
        %v410 = vsel %vm402, %v389, %v392
        %v411 = vsel %vm405, %v398, 920167782
        %v412 = vsel %vm404, %v395, %v411
        %v413 = vsel %vm403, %v410, %v412
        %v414 = vsel %vm402, %v392, %v395
        %v415 = vsel %vm405, %v401, 1326507024
        %v416 = vsel %vm404, %v398, %v415
        %v417 = vsel %vm403, %v414, %v416
        %v418 = vshll.u32 %v378, 8
        %v419 = vmul.u32.u64.compose %v418, %v417
        %v420 = vextract.low.u32 %v419
        %v421 = vextract.high.u32 %v419
        %v422 = vmul.u32.u64.compose %v418, %v413
        %v423 = vextract.low.u32 %v422
        %v424 = vextract.high.u32 %v422
        %v425 = vmul.u32 %v418, %v409
        %v426 = vadd.s32 %v421, %v423
        %vm427 = vc.u32 %v421, %v423
        %v428 = vadd.s32 %v424, 1
        %v429 = vsel %vm427, %v428, %v424
        %v430 = vadd.s32 %v425, %v429
        %v431 = vadd.s32 %v430, 536870912
        %v432 = vshrl.u32 %v431, 30
        %v433 = vshll.u32 %v432, 30
        %v434 = vsub.s32 %v430, %v433
        %vm435 = vcmp.lt.s32.totalorder %v434, 0
        %v436 = vsub.s32 0, %v434
        %v437 = vsel %vm435, %v436, %v434
        %v438 = vclz %v437
        %v439 = vsub.s32 %v438, 2
        %vm440 = vcmp.gt.s32.totalorder 0, %v439
        %v441 = vsel %vm440, 0, %v439
        %v442 = vsub.s32 32, %v441
        %v443 = vshll.u32 %v434, %v441
        %v444 = vshrl.u32 %v426, %v442
        %v445 = vor.u32 %v443, %v444
        %v446 = vsub.s32 4294967266, %v441
        %v447 = vadd.s32 %v446, 127
        %v448 = vshll.u32 %v447, 23
        %v449 = vor.u32 4788187, %v448
        %v450 = vand.u32 2147483647, %v449
        %v452 = vcvt.s32.f32 %v445
        %v453 = vmul.f32 %v452, %v450
        %v454 = vxor.u32 %v453, 2147483648
        %v455 = vsel %vm372, %v454, %v453
        %v456 = vsub.s32 4, %v432
        %v457 = vsel %vm372, %v456, %v432
        %v458 = vsel %vm371, %v365, %v455
        %v459 = vsel %vm371, 0, %v457
        %v460 = vcosq.f32.pop %v458
        %v461 = vsinq.f32.pop %v458
        %vm462 = vweird.f32 %v365
        %v463 = vand.u32 %v459, 3
        %vm464 = vcmp.lt.s32.totalorder %v463, 2
        %vm465 = vcmp.eq.s32.totalorder %v463, 0
        %v466 = vxor.u32 %v461, 2147483648
        %v467 = vsel %vm465, %v460, %v466
        %vm468 = vcmp.eq.s32.totalorder %v463, 2
        %v469 = vxor.u32 %v460, 2147483648
        %v470 = vsel %vm468, %v469, %v461
        %v471 = vsel %vm464, %v467, %v470
        %v472 = vsel %vm462, nan, %v471
        %v473 = vsel %vm369, 1, 0
        %v474 = vlaneseq
        %v475 = vshrl.u32 %v474, 7
        %v476 = vsub.s32 0, %v475
        %v477 = vrot.slane %v473, %v476
        %vm478 = vcmp.eq.s32.totalorder %v477, 1
        %v479 = vsel %vm478, %v472, %v365
        %480 = vst [vmem:[%s262] sm:$0xff] %v479
        %s481 = sand.u32 %s124, 1
        %s482 = scalar_lea.sflag [#allocation4], %s481
        %s483 = sand.u32 %s124, 1
        %s484 = smul.addr %s483, 8
        %s485 = scalar_lea.vmem [#allocation8], %s484
        // Predicated region
        $region49: #{tpu_custom_call.1} parent=35 // pred_check
          %p486 = pneg %p134
        $region50: #{tpu_custom_call.1} parent=35 // pred_check_branch
          %488 = sbr.rel (%p486) target = $region52
        $region51: #{tpu_custom_call.1} parent=35 // pred_region
          %s490 = ssub.s32 128, 128
          %491 = vsyncadd %s482, %s490
          %s492 = smul.addr %s22, 128
          %s493 = scalar_lea.hbm %s4, %s492
          %s495 = sshll.u32 %s485, 4
          %s496 = int_to_ptr.vmem [resolvable:$true] %s495
          %498 = dma.vmem_to_hbm [thread:$0]  %s496, 128, %s493, %s482
        $region52: #{tpu_custom_call.1} parent=35 // pred_fallthru
          _
      $region36: #{tpu_custom_call.1} parent=5 // pred_fallthru
        _
      %p499 = scmp.le.s32.totalorder 2, %s17
      // Predicated region
      $region53: #{tpu_custom_call.1} parent=5 // pred_check
        %p500 = pneg %p499
      $region54: #{tpu_custom_call.1} parent=5 // pred_check_branch
        %502 = sbr.rel (%p500) target = $region56
      $region55: #{tpu_custom_call.1} parent=5 // pred_region
        %s503 = ssub.s32 %s17, 2
        // Predicated region
        $region57: #{tpu_custom_call.1} parent=55 // pred_check
          %p504 = pneg %p140
        $region58: #{tpu_custom_call.1} parent=55 // pred_check_branch
          %506 = sbr.rel (%p504) target = $region60
        $region59: #{tpu_custom_call.1} parent=55 // pred_region
          %s507 = sand.u32 %s125, 1
          %s508 = scalar_lea.sflag [#allocation4], %s507
          %s509 = sand.u32 %s125, 1
          %s510 = smul.addr %s509, 8
          %s511 = scalar_lea.vmem [#allocation8], %s510
          %512 = dma.done %s508, 128
        $region60: #{tpu_custom_call.1} parent=55 // pred_fallthru
          _
      $region56: #{tpu_custom_call.1} parent=5 // pred_fallthru
        _
    $region6: #{tpu_custom_call.1} parent=1 // loop_footer
      %s21 = sadd.s32 1, %s17
    $region7: #{tpu_custom_call.1} parent=1 // loop_footer_branch
      %16 = sbr.rel target = $region3
    $region8: #{tpu_custom_call.1} parent=1 // loop_exit
      _
    %513 = vsyncpa [#allocation3], 1
    %s514 = scalar_lea.sflag [#allocation3], 1
    %515 = vsyncpa %s514, 1
    %516 = vsyncpa [#allocation6], 1
    %517 = vsyncpa [#allocation4], 1
    %s518 = scalar_lea.sflag [#allocation4], 1
    %519 = vsyncpa %s518, 1

</llo_original>
